<compile_context>
chip_gen: v7x
topology: tpu7x:2x2x1
jax: 0.10.0
libtpu: 0.0.40
codegen_flags: <defaults>
</compile_context>

<pallas_src>
import functools

import jax
import jax.numpy as jnp
from jax.experimental import pallas as pl
from jax.experimental.pallas import tpu as pltpu

_LANE = 128
_SUBLANE = 8


def _ffn_kernel(x_ref, w13_ref, w2_ref, o_ref, *scratch, th, nk, compute_dtype):
    """One (token tile i, hidden tile k) grid step.

    x_ref:   (tm, dim)    activations in their original dtype (cast in-kernel)
    w13_ref: (dim, 2*th)  [W1_k | W3_k] fused weight tile, bf16
    w2_ref:  (th, dim)    W2_k weight tile, bf16
    o_ref:   (tm, dim)    output tile, written on the last k step only
    scratch: optional (tm, dim) f32 accumulator (only allocated when nk > 1)
    """
    x = x_ref[...].astype(compute_dtype)
    # Single fused MXU matmul for the W1 and W3 projections of this hidden tile.
    h = jnp.dot(x, w13_ref[...], preferred_element_type=jnp.float32)  # (tm, 2*th) f32
    h1 = h[:, :th]
    h3 = h[:, th:]
    # silu(h1) = h1 * sigmoid(h1); exp and the approximate reciprocal both run
    # on the EUP slot instead of a VALU-heavy logistic/divide expansion.
    gated = h1 * pl.reciprocal(1.0 + jnp.exp(-h1), approx=True) * h3
    contrib = jnp.dot(gated.astype(compute_dtype), w2_ref[...],
                      preferred_element_type=jnp.float32)             # (tm, dim) f32

    if nk == 1:
        o_ref[...] = contrib.astype(o_ref.dtype)
        return

    acc_ref = scratch[0]
    k = pl.program_id(1)

    @pl.when(k == 0)
    def _():
        acc_ref[...] = contrib

    @pl.when(jnp.logical_and(k > 0, k < nk - 1))
    def _():
        acc_ref[...] += contrib

    @pl.when(k == nk - 1)
    def _():
        # Fold the last contribution directly into the output write: saves one
        # full (tm, dim) f32 accumulator store + reload per token tile.
        o_ref[...] = (acc_ref[...] + contrib).astype(o_ref.dtype)


def _round_up(x, m):
    return (x + m - 1) // m * m


def _pick_th(hidden, target=512):
    """Largest multiple of 128 <= target that divides hidden (fallback: hidden)."""
    if hidden % _LANE != 0:
        return hidden
    th = max(_LANE, (min(target, hidden) // _LANE) * _LANE)
    while hidden % th != 0:
        th -= _LANE
    return th


def _vmem_capacity_bytes():
    """Physical per-core VMEM (v5e/v6e: 128 MiB, v7x: 64 MiB). Conservative fallback."""
    try:
        cap = int(pltpu.get_tpu_info().vmem_capacity_bytes)
        if cap > 0:
            return cap
    except Exception:
        pass
    return 64 * 1024 * 1024


def _tile_bytes(tm, th, dim, xbytes, obytes, wbytes):
    """Approximate VMEM footprint of one grid step (double-buffered pipeline)."""
    return (2 * tm * dim * xbytes          # x tile (orig dtype, double-buffered)
            + 2 * dim * (2 * th) * wbytes  # fused [W1|W3] tile (double-buffered)
            + 2 * th * dim * wbytes        # W2 tile (double-buffered)
            + 2 * tm * dim * obytes        # output tile (double-buffered)
            + tm * dim * 4                 # f32 accumulator scratch
            + tm * (2 * th) * 4            # f32 h = x @ w13 intermediate
            + tm * th * wbytes)            # gated temporary


def _pick_tm(tm_req, m, th, dim, xbytes, obytes, wbytes, budget):
    """Largest token tile that fits the VMEM budget, capped by the request and M."""
    m_aligned = _round_up(max(m, 1), _SUBLANE)
    if m_aligned <= _LANE:
        return m_aligned                   # tiny (decode-style) call: one small tile
    tm = min(max(tm_req, _LANE), 1024, m_aligned)
    tm = max(_LANE, (tm // _LANE) * _LANE)
    while tm > _LANE and _tile_bytes(tm, th, dim, xbytes, obytes, wbytes) > budget:
        tm -= _LANE
    return tm


def pack_ffn_weights(w1, w2, w3, *, th, compute_dtype=jnp.bfloat16):
    """Pack PyTorch nn.Linear-layout weights ONCE, outside the per-call hot path.

    w1, w3: (hidden, dim);  w2: (dim, hidden)
    Returns:
      w13: (dim, 2*hidden) bf16, hidden-tile interleaved
           [W1_tile0 | W3_tile0 | W1_tile1 | W3_tile1 | ...]
      w2t: (hidden, dim) bf16
    """
    hidden, dim = w1.shape
    assert hidden % th == 0, "hidden_dim must be divisible by the hidden tile th"
    kt = hidden // th
    w1_t = w1.T.astype(compute_dtype).reshape(dim, kt, th)
    w3_t = w3.T.astype(compute_dtype).reshape(dim, kt, th)
    w13 = jnp.stack([w1_t, w3_t], axis=2).reshape(dim, 2 * hidden)
    w2t = w2.T.astype(compute_dtype)
    return w13, w2t


def feed_forward_packed(x, w13, w2t, *, th, tm=512, min_m_tiles=1,
                        compute_dtype=jnp.bfloat16):
    """x: (..., dim); w13: (dim, 2*hidden) packed; w2t: (hidden, dim)."""
    orig_shape = x.shape
    orig_dtype = x.dtype
    dim = orig_shape[-1]
    hidden = w2t.shape[0]
    assert w13.shape == (dim, 2 * hidden) and w2t.shape == (hidden, dim)
    assert hidden % th == 0
    kt = hidden // th

    # No host-side cast/pad pre-pass: x is streamed in its original dtype and
    # cast per tile in-kernel; ragged trailing token tiles are handled by the
    # pl.cdiv grid + Pallas' masked block writes.
    x2d = x.reshape(-1, dim)
    m = x2d.shape[0]

    xbytes = jnp.dtype(orig_dtype).itemsize
    obytes = xbytes
    wbytes = jnp.dtype(compute_dtype).itemsize

    capacity = _vmem_capacity_bytes()
    budget = int(0.85 * capacity)

    tm_eff = _pick_tm(tm, m, th, dim, xbytes, obytes, wbytes, budget)
    if min_m_tiles > 1 and m > _SUBLANE:
        # v7x small-M/decode: keep >= min_m_tiles token tiles so the "parallel"
        # token axis can be sharded across both TensorCores.
        tm_eff = max(_SUBLANE,
                     min(tm_eff, _round_up(pl.cdiv(m, min_m_tiles), _SUBLANE)))

    grid_i = pl.cdiv(m, tm_eff)

    vmem_need = _tile_bytes(tm_eff, th, dim, xbytes, obytes, wbytes)
    # Cap the scoped-VMEM limit below physical VMEM (v7x: 64 MiB per TC).
    vmem_limit = min(int(0.9 * capacity),
                     max(32 * 1024 * 1024, int(1.25 * vmem_need)))

    cost = pl.CostEstimate(
        flops=6 * m * dim * hidden,                 # 3 matmuls @ 2*M*dim*hidden
        transcendentals=m * hidden,                 # exp in silu
        bytes_accessed=(m * dim * xbytes                        # x read (once)
                        + grid_i * (dim * 2 * hidden * wbytes   # w13 per token tile
                                    + hidden * dim * wbytes)    # w2  per token tile
                        + m * dim * obytes),                    # output write
    )

    kernel = functools.partial(_ffn_kernel, th=th, nk=kt, compute_dtype=compute_dtype)
    scratch = [pltpu.VMEM((tm_eff, dim), jnp.float32)] if kt > 1 else []

    out = pl.pallas_call(
        kernel,
        out_shape=jax.ShapeDtypeStruct((m, dim), orig_dtype),
        grid_spec=pltpu.PrefetchScalarGridSpec(
            num_scalar_prefetch=0,
            grid=(grid_i, kt),          # tokens (parallel), hidden (reduction) last
            in_specs=[
                # x block index is constant across k, so Pallas only re-fetches
                # it once per token tile.  (On v7x one could additionally request
                # single-buffering of this spec to reclaim tm*dim bytes of VMEM.)
                pl.BlockSpec((tm_eff, dim), lambda i, k: (i, 0)),
                pl.BlockSpec((dim, 2 * th), lambda i, k: (0, k)),
                pl.BlockSpec((th, dim), lambda i, k: (k, 0)),
            ],
            out_specs=pl.BlockSpec((tm_eff, dim), lambda i, k: (i, 0)),
            scratch_shapes=scratch,
        ),
        compiler_params=pltpu.CompilerParams(
            dimension_semantics=("parallel", "arbitrary"),
            vmem_limit_bytes=vmem_limit),
        cost_estimate=cost,
    )(x2d, w13, w2t)

    return out.reshape(orig_shape)


def feed_forward(x, w1, w2, w3, *, tm=512, th=None, min_m_tiles=1,
                 compute_dtype=jnp.bfloat16):
    """Convenience wrapper taking raw PyTorch-layout weights.

    For repeated calls (training / decode loops), call pack_ffn_weights() once
    and use feed_forward_packed() so the transpose/pack/cast stays off the hot
    path.
    """
    hidden = w1.shape[0]
    if th is None:
        th = _pick_th(hidden)
    w13, w2t = pack_ffn_weights(w1, w2, w3, th=th, compute_dtype=compute_dtype)
    return feed_forward_packed(x, w13, w2t, th=th, tm=tm,
                               min_m_tiles=min_m_tiles,
                               compute_dtype=compute_dtype)


def _ref(x, w1, w2, w3, compute_dtype=jnp.bfloat16):
    """Reference with the same bf16-matmul / f32-accumulate numerics."""
    cd = compute_dtype
    x2 = x.reshape(-1, x.shape[-1]).astype(cd)
    h1 = jnp.dot(x2, w1.T.astype(cd), preferred_element_type=jnp.float32)
    h3 = jnp.dot(x2, w3.T.astype(cd), preferred_element_type=jnp.float32)
    g = (h1 * jax.nn.sigmoid(h1) * h3).astype(cd)
    out = jnp.dot(g, w2.T.astype(cd), preferred_element_type=jnp.float32)
    return out.reshape(x.shape).astype(x.dtype)


if __name__ == "__main__":
    batch, seq, dim, hidden_dim = 2, 8, 256, 512

    key = jax.random.PRNGKey(0)
    kx, k1, k2, k3 = jax.random.split(key, 4)

    x = jax.random.normal(kx, (batch, seq, dim), dtype=jnp.float32)
    # nn.Linear(dim, hidden_dim, bias=False) -> weight shape (hidden_dim, dim)
    bound1 = 1.0 / (dim ** 0.5)
    bound2 = 1.0 / (hidden_dim ** 0.5)
    w1 = jax.random.uniform(k1, (hidden_dim, dim), jnp.float32, -bound1, bound1)
    w3 = jax.random.uniform(k3, (hidden_dim, dim), jnp.float32, -bound1, bound1)
    w2 = jax.random.uniform(k2, (dim, hidden_dim), jnp.float32, -bound2, bound2)

    y_ref = _ref(x, w1, w2, w3)

    # 1) Packed-weight path with th=256 (2 hidden tiles -> exercises the
    #    k-axis accumulator + fused final write).
    th = 256
    w13, w2t = pack_ffn_weights(w1, w2, w3, th=th)
    y = jax.block_until_ready(feed_forward_packed(x, w13, w2t, th=th))
    assert y.shape == x.shape and y.dtype == x.dtype
    err = float(jnp.max(jnp.abs(y - y_ref)))
    assert jnp.allclose(y, y_ref, atol=1e-2, rtol=1e-2), f"kt=2 max abs err {err:.3e}"

    # 2) Convenience path with a single hidden tile (kt == 1, no accumulator).
    y1 = jax.block_until_ready(feed_forward(x, w1, w2, w3, th=hidden_dim))
    err1 = float(jnp.max(jnp.abs(y1 - y_ref)))
    assert jnp.allclose(y1, y_ref, atol=1e-2, rtol=1e-2), f"kt=1 max abs err {err1:.3e}"

    print("KERNEL_OK")
</pallas_src>

<mosaic_0001>
module attributes {stable_mosaic.version = 11 : i64} {
  func.func @_ffn_kernel(%arg0: i32, %arg1: i32, %arg2: memref<16x256xf32, #tpu.memory_space<vmem>>, %arg3: memref<256x512xbf16, #tpu.memory_space<vmem>>, %arg4: memref<256x256xbf16, #tpu.memory_space<vmem>>, %arg5: memref<16x256xf32, #tpu.memory_space<vmem>>, %arg6: memref<16x256xf32, #tpu.memory_space<vmem>>) attributes {dimension_semantics = [#tpu.dimension_semantics<parallel>, #tpu.dimension_semantics<arbitrary>], iteration_bounds = array<i64: 1, 2>, scalar_prefetch = 0 : i64, scratch_operands = 1 : i64, tpu.core_type = #tpu.core_type<tc>, window_params = [{transform_indices = @transform_0, window_bounds = array<i64: 16, 256>}, {transform_indices = @transform_1, window_bounds = array<i64: 256, 512>}, {transform_indices = @transform_2, window_bounds = array<i64: 256, 256>}, {transform_indices = @transform_3, window_bounds = array<i64: 16, 256>}]} {
    %c0 = arith.constant 0 : index
    %c0_0 = arith.constant 0 : index
    %0 = vector.load %arg2[%c0, %c0_0] : memref<16x256xf32, #tpu.memory_space<vmem>>, vector<16x256xf32>
    %1 = arith.truncf %0 : vector<16x256xf32> to vector<16x256xbf16>
    %c0_1 = arith.constant 0 : index
    %c0_2 = arith.constant 0 : index
    %2 = vector.load %arg3[%c0_1, %c0_2] : memref<256x512xbf16, #tpu.memory_space<vmem>>, vector<256x512xbf16>
    %cst = arith.constant dense<0.000000e+00> : vector<16x512xf32>
    %3 = tpu.matmul %1, %2, %cst {dimension_numbers = #tpu.dot_dimension_numbers<[1], [0], [0], [1], [0, 0, 1, 1], [], []>} : vector<16x256xbf16>, vector<256x512xbf16>, vector<16x512xf32> -> vector<16x512xf32>
    %4 = vector.extract_strided_slice %3 {offsets = [0, 0], sizes = [16, 256], strides = [1, 1]} : vector<16x512xf32> to vector<16x256xf32>
    %5 = vector.extract_strided_slice %3 {offsets = [0, 256], sizes = [16, 256], strides = [1, 1]} : vector<16x512xf32> to vector<16x256xf32>
    %cst_3 = arith.constant 0.000000e+00 : f32
    %6 = vector.broadcast %cst_3 : f32 to vector<16x256xf32>
    %7 = arith.subf %6, %4 : vector<16x256xf32>
    %8 = math.exp %7 : vector<16x256xf32>
    %cst_4 = arith.constant 1.000000e+00 : f32
    %9 = vector.broadcast %cst_4 : f32 to vector<16x256xf32>
    %10 = arith.addf %9, %8 : vector<16x256xf32>
    %11 = tpu.reciprocal %10 {approx = true} : vector<16x256xf32> -> vector<16x256xf32>
    %12 = arith.mulf %4, %11 : vector<16x256xf32>
    %13 = arith.mulf %12, %5 : vector<16x256xf32>
    %14 = arith.truncf %13 : vector<16x256xf32> to vector<16x256xbf16>
    %c0_5 = arith.constant 0 : index
    %c0_6 = arith.constant 0 : index
    %15 = vector.load %arg4[%c0_5, %c0_6] : memref<256x256xbf16, #tpu.memory_space<vmem>>, vector<256x256xbf16>
    %cst_7 = arith.constant dense<0.000000e+00> : vector<16x256xf32>
    %16 = tpu.matmul %14, %15, %cst_7 {dimension_numbers = #tpu.dot_dimension_numbers<[1], [0], [0], [1], [0, 0, 1, 1], [], []>} : vector<16x256xbf16>, vector<256x256xbf16>, vector<16x256xf32> -> vector<16x256xf32>
    %c0_i32 = arith.constant 0 : i32
    %17 = arith.cmpi eq, %arg1, %c0_i32 : i32
    %18 = arith.extui %17 : i1 to i32
    %c0_i32_8 = arith.constant 0 : i32
    %19 = arith.cmpi ne, %18, %c0_i32_8 : i32
    scf.if %19 {
      %c0_13 = arith.constant 0 : index
      %c0_14 = arith.constant 0 : index
      %28 = vector.load %arg6[%c0_13, %c0_14] : memref<16x256xf32, #tpu.memory_space<vmem>>, vector<16x256xf32>
      tpu.vector_store %arg6[%c0_13, %c0_14], %16 {strides = array<i32>} : memref<16x256xf32, #tpu.memory_space<vmem>>, vector<16x256xf32>,
    } else {
    }
    %c0_i32_9 = arith.constant 0 : i32
    %20 = arith.cmpi sgt, %arg1, %c0_i32_9 : i32
    %c1_i32 = arith.constant 1 : i32
    %21 = arith.cmpi slt, %arg1, %c1_i32 : i32
    %22 = arith.andi %20, %21 : i1
    %23 = arith.extui %22 : i1 to i32
    %c0_i32_10 = arith.constant 0 : i32
    %24 = arith.cmpi ne, %23, %c0_i32_10 : i32
    scf.if %24 {
      %c0_13 = arith.constant 0 : index
      %c0_14 = arith.constant 0 : index
      %28 = vector.load %arg6[%c0_13, %c0_14] : memref<16x256xf32, #tpu.memory_space<vmem>>, vector<16x256xf32>
      %29 = arith.addf %28, %16 : vector<16x256xf32>
      %c0_15 = arith.constant 0 : index
      %c0_16 = arith.constant 0 : index
      %30 = vector.load %arg6[%c0_15, %c0_16] : memref<16x256xf32, #tpu.memory_space<vmem>>, vector<16x256xf32>
      tpu.vector_store %arg6[%c0_15, %c0_16], %29 {strides = array<i32>} : memref<16x256xf32, #tpu.memory_space<vmem>>, vector<16x256xf32>,
    } else {
    }
    %c1_i32_11 = arith.constant 1 : i32
    %25 = arith.cmpi eq, %arg1, %c1_i32_11 : i32
    %26 = arith.extui %25 : i1 to i32
    %c0_i32_12 = arith.constant 0 : i32
    %27 = arith.cmpi ne, %26, %c0_i32_12 : i32
    scf.if %27 {
      %c0_13 = arith.constant 0 : index
      %c0_14 = arith.constant 0 : index
      %28 = vector.load %arg6[%c0_13, %c0_14] : memref<16x256xf32, #tpu.memory_space<vmem>>, vector<16x256xf32>
      %29 = arith.addf %28, %16 : vector<16x256xf32>
      %c0_15 = arith.constant 0 : index
      %c0_16 = arith.constant 0 : index
      %30 = vector.load %arg5[%c0_15, %c0_16] : memref<16x256xf32, #tpu.memory_space<vmem>>, vector<16x256xf32>
      tpu.vector_store %arg5[%c0_15, %c0_16], %29 {strides = array<i32>} : memref<16x256xf32, #tpu.memory_space<vmem>>, vector<16x256xf32>,
    } else {
    }
    return
  }
  func.func @transform_0(%arg0: i32, %arg1: i32) -> (i32, i32) {
    %c0_i32 = arith.constant 0 : i32
    %c0_i32_0 = arith.constant 0 : i32
    return %arg0, %c0_i32 : i32, i32
  }
  func.func @transform_1(%arg0: i32, %arg1: i32) -> (i32, i32) {
    %c0_i32 = arith.constant 0 : i32
    %c0_i32_0 = arith.constant 0 : i32
    return %c0_i32, %arg1 : i32, i32
  }
  func.func @transform_2(%arg0: i32, %arg1: i32) -> (i32, i32) {
    %c0_i32 = arith.constant 0 : i32
    %c0_i32_0 = arith.constant 0 : i32
    return %arg1, %c0_i32 : i32, i32
  }
  func.func @transform_3(%arg0: i32, %arg1: i32) -> (i32, i32) {
    %c0_i32 = arith.constant 0 : i32
    %c0_i32_0 = arith.constant 0 : i32
    return %arg0, %c0_i32 : i32, i32
  }
}

</mosaic_0001>

<llo_original>
// kernel: tpu_custom_call.1
$region0: #{tpu_custom_call.1}
  #allocation0 [shape = 'u32[]', space=smem, size = 0x4, offset = 0x4, fixed_abs, tag = 'smem constant byte address 0x4 - core index']
  #allocation1 [shape = 'u32[144,128]{1,0:T(1,128)}', space=vmem, size = 0x12000, scoped, tag = 'internal scratch']
  #allocation2 [shape = 'f32[16,256]{1,0:T(8,128)}', space=vmem, size = 0x4000, scoped, tag = 'scratch operand']
  %s0 = inlined_call_operand.hbm [shape: f32[16,256], index: 0, kind: input, shape index: {}]
  %s1 = inlined_call_operand.hbm [shape: bf16[256,1024], index: 1, kind: input, shape index: {}]
  %s2 = inlined_call_operand.hbm [shape: bf16[512,256], index: 2, kind: input, shape index: {}]
  %s3 = inlined_call_operand.hbm [shape: f32[16,256], index: 3, kind: output, shape index: {}]
  %s4 = sld [smem:[#allocation0]]
  $region69: #{tpu_custom_call.1} parent=0
    _
  %s6 = ssub.s32 1, %s4
  %s7 = scalar_select 0, %s6, %s4
  $region1: #{tpu_custom_call.1} parent=0
    #allocation3 [shape = 'u8[16384]{0}', space=vmem, size = 0x4000, scoped, tag = 'input window, operand 0, single buffered']
    #allocation4 [shape = 's32[2]{0}', space=sflag, size = 0x8, scoped, tag = 'scoped memory for tpu_custom_call.1']
    #allocation5 [shape = 's32[2]{0}', space=sflag, size = 0x8, scoped, tag = 'scoped memory for tpu_custom_call.1']
    #allocation6 [shape = 'u8[524288]{0}', space=vmem, size = 0x80000, scoped, tag = 'input window, operand 1']
    #allocation7 [shape = 's32[2]{0}', space=sflag, size = 0x8, scoped, tag = 'scoped memory for tpu_custom_call.1']
    #allocation8 [shape = 'u8[262144]{0}', space=vmem, size = 0x40000, scoped, tag = 'input window, operand 2']
    #allocation9 [shape = 'u8[16384]{0}', space=vmem, size = 0x4000, scoped, tag = 'output window, operand 0, single buffered']
    %8 = vsyncpa [#allocation4], 0
    %9 = vsyncpa [#allocation7], 0
    %s10 = scalar_lea.sflag [#allocation7], 1
    %11 = vsyncpa %s10, 0
    %12 = vsyncpa [#allocation5], 0
    loop: start=0, step=1, limit=4
    $region2: #{tpu_custom_call.1} parent=1 // loop_pre_header
      _
    $region3: #{tpu_custom_call.1} parent=1 // loop_header
      %s14 = sphi 0, %s18
      %p15 = scmp.ge.s32.totalorder %s14, 4
      %s21 = sphi 0, %s33
      %s22 = sphi 0, %s29
      %s23 = sphi 0, %s21
      %s24 = sphi 0, %s22
      %s25 = sphi 0, %s23
      %s26 = sphi 0, %s24
      %s36 = sphi 0, %s38
      %s39 = sphi 0, %s36
      %s40 = sphi 0, %s39
      %s56 = sphi 0, %s40
      %s62 = sphi 0, %s64
      %s65 = sphi 0, %s62
      %s66 = sphi 0, %s65
      %s82 = sphi 0, %s66
      %s88 = sphi 0, %s90
      %s91 = sphi 0, %s88
      %s92 = sphi 0, %s91
      %s108 = sphi 0, %s92
      %s114 = sphi 0, %s116
      %s117 = sphi 0, %s114
      %s118 = sphi 0, %s117
      %s134 = sphi 0, %s118
    $region4: #{tpu_custom_call.1} parent=1 // loop_header_branch
      %17 = sbr.rel (%p15) target = $region8
    $region5: #{tpu_custom_call.1} parent=1 // loop_body
      %s19 = ssub.s32 %s14, 1
      %s20 = ssub.s32 %s14, 2
      %s27 = sadd.s32 1, %s22
      %p28 = scmp.ge.s32.totalorder %s27, 2
      %s29 = scalar_select %p28, 0, %s27
      %s30 = sadd.s32 1, %s21
      %s31 = scalar_select %p28, %s30, %s21
      %p32 = scmp.ge.s32.totalorder %s31, 1
      %s33 = scalar_select %p32, 0, %s31
      %s34 = ssub.s32 %s21, %s33
      %p35 = scmp.eq.s32.totalorder %s34, 0
      %s37 = sadd.s32 %s36, 1
      %s38 = scalar_select %p35, %s36, %s37
      %p41 = pneg %p35
      %p42 = scmp.eq.s32.totalorder %s14, 1
      %p43 = por %p41, %p42
      %p44 = scmp.ne.s32.totalorder %s36, %s39
      %p45 = scmp.eq.s32.totalorder %s14, 0
      %p46 = por %p44, %p45
      %p47 = scmp.ne.s32.totalorder %s36, %s39
      %p48 = scmp.eq.s32.totalorder %s19, 1
      %p49 = por %p47, %p48
      %p50 = scmp.ne.s32.totalorder %s39, %s40
      %p51 = scmp.eq.s32.totalorder %s19, 0
      %p52 = por %p50, %p51
      %p53 = scmp.ne.s32.totalorder %s39, %s40
      %p54 = scmp.eq.s32.totalorder %s20, 1
      %p55 = por %p53, %p54
      %p57 = scmp.ne.s32.totalorder %s40, %s56
      %p58 = scmp.eq.s32.totalorder %s20, 0
      %p59 = por %p57, %p58
      %s60 = ssub.s32 %s22, %s29
      %p61 = scmp.eq.s32.totalorder %s60, 0
      %s63 = sadd.s32 %s62, 1
      %s64 = scalar_select %p61, %s62, %s63
      %p67 = pneg %p61
      %p68 = scmp.eq.s32.totalorder %s14, 1
      %p69 = por %p67, %p68
      %p70 = scmp.ne.s32.totalorder %s62, %s65
      %p71 = scmp.eq.s32.totalorder %s14, 0
      %p72 = por %p70, %p71
      %p73 = scmp.ne.s32.totalorder %s62, %s65
      %p74 = scmp.eq.s32.totalorder %s19, 1
      %p75 = por %p73, %p74
      %p76 = scmp.ne.s32.totalorder %s65, %s66
      %p77 = scmp.eq.s32.totalorder %s19, 0
      %p78 = por %p76, %p77
      %p79 = scmp.ne.s32.totalorder %s65, %s66
      %p80 = scmp.eq.s32.totalorder %s20, 1
      %p81 = por %p79, %p80
      %p83 = scmp.ne.s32.totalorder %s66, %s82
      %p84 = scmp.eq.s32.totalorder %s20, 0
      %p85 = por %p83, %p84
      %s86 = ssub.s32 %s22, %s29
      %p87 = scmp.eq.s32.totalorder %s86, 0
      %s89 = sadd.s32 %s88, 1
      %s90 = scalar_select %p87, %s88, %s89
      %p93 = pneg %p87
      %p94 = scmp.eq.s32.totalorder %s14, 1
      %p95 = por %p93, %p94
      %p96 = scmp.ne.s32.totalorder %s88, %s91
      %p97 = scmp.eq.s32.totalorder %s14, 0
      %p98 = por %p96, %p97
      %p99 = scmp.ne.s32.totalorder %s88, %s91
      %p100 = scmp.eq.s32.totalorder %s19, 1
      %p101 = por %p99, %p100
      %p102 = scmp.ne.s32.totalorder %s91, %s92
      %p103 = scmp.eq.s32.totalorder %s19, 0
      %p104 = por %p102, %p103
      %p105 = scmp.ne.s32.totalorder %s91, %s92
      %p106 = scmp.eq.s32.totalorder %s20, 1
      %p107 = por %p105, %p106
      %p109 = scmp.ne.s32.totalorder %s92, %s108
      %p110 = scmp.eq.s32.totalorder %s20, 0
      %p111 = por %p109, %p110
      %s112 = ssub.s32 %s21, %s33
      %p113 = scmp.eq.s32.totalorder %s112, 0
      %s115 = sadd.s32 %s114, 1
      %s116 = scalar_select %p113, %s114, %s115
      %p119 = pneg %p113
      %p120 = scmp.eq.s32.totalorder %s14, 1
      %p121 = por %p119, %p120
      %p122 = scmp.ne.s32.totalorder %s114, %s117
      %p123 = scmp.eq.s32.totalorder %s14, 0
      %p124 = por %p122, %p123
      %p125 = scmp.ne.s32.totalorder %s114, %s117
      %p126 = scmp.eq.s32.totalorder %s19, 1
      %p127 = por %p125, %p126
      %p128 = scmp.ne.s32.totalorder %s117, %s118
      %p129 = scmp.eq.s32.totalorder %s19, 0
      %p130 = por %p128, %p129
      %p131 = scmp.ne.s32.totalorder %s117, %s118
      %p132 = scmp.eq.s32.totalorder %s20, 1
      %p133 = por %p131, %p132
      %p135 = scmp.ne.s32.totalorder %s118, %s134
      %p136 = scmp.eq.s32.totalorder %s20, 0
      %p137 = por %p135, %p136
      %p138 = scmp.le.s32.totalorder 1, %s14
      %p139 = scmp.lt.s32.totalorder %s14, 3
      %p140 = pnand %p138, %p139
      %p141 = pneg %p140
      // Predicated region
      $region9: #{tpu_custom_call.1} parent=5 // pred_check
        _
      $region10: #{tpu_custom_call.1} parent=5 // pred_check_branch
        %143 = sbr.rel (%p140) target = $region12
      $region11: #{tpu_custom_call.1} parent=5 // pred_region
        %s144 = ssub.s32 %s14, 1
        // Predicated region
        $region13: #{tpu_custom_call.1} parent=11 // pred_check
          %p145 = pneg %p52
        $region14: #{tpu_custom_call.1} parent=11 // pred_check_branch
          %147 = sbr.rel (%p145) target = $region16
        $region15: #{tpu_custom_call.1} parent=11 // pred_region
          %s148 = smul.u32 2, %s23
          %s150 = ssub.s32 512, 512
          %151 = vsyncadd [#allocation4], %s150
          %s152 = smul.addr %s148, 2
          %s153 = smul.addr %s152, 128
          %s154 = scalar_lea.hbm %s0, %s153
          %s155 = sshll.u32 [#allocation3], 4
          %s156 = int_to_ptr.vmem [resolvable:$true] %s155
          %161 = dma.hbm_to_vmem [thread:$0]  %s154, 512, %s156, [#allocation4], 256, 256, 16
        $region16: #{tpu_custom_call.1} parent=11 // pred_fallthru
          _
      $region12: #{tpu_custom_call.1} parent=5 // pred_fallthru
        _
      %p162 = scmp.lt.s32.totalorder %s14, 2
      // Predicated region
      $region17: #{tpu_custom_call.1} parent=5 // pred_check
        %p163 = pneg %p162
      $region18: #{tpu_custom_call.1} parent=5 // pred_check_branch
        %165 = sbr.rel (%p163) target = $region20
      $region19: #{tpu_custom_call.1} parent=5 // pred_region
        // Predicated region
        $region21: #{tpu_custom_call.1} parent=19 // pred_check
          %p166 = pneg %p72
        $region22: #{tpu_custom_call.1} parent=19 // pred_check_branch
          %168 = sbr.rel (%p166) target = $region24
        $region23: #{tpu_custom_call.1} parent=19 // pred_region
          %s169 = sand.u32 %s14, 1
          %s170 = scalar_lea.sflag [#allocation7], %s169
          %s171 = sand.u32 %s62, 1
          %s172 = smul.addr %s171, 512
          %s173 = scalar_lea.vmem [#allocation6], %s172
          %s174 = smul.u32 4, %s22
          %s176 = ssub.s32 8192, 8192
          %177 = vsyncadd %s170, %s176
          %s178 = smul.addr %s174, 64
          %s179 = scalar_lea.hbm %s1, %s178
          %s180 = sshll.u32 %s173, 4
          %s181 = int_to_ptr.vmem [resolvable:$true] %s180
          %186 = dma.hbm_to_vmem [thread:$0]  %s179, 8192, %s181, %s170, 512, 256, 16
        $region24: #{tpu_custom_call.1} parent=19 // pred_fallthru
          _
        // Predicated region
        $region25: #{tpu_custom_call.1} parent=19 // pred_check
          %p187 = pneg %p98
        $region26: #{tpu_custom_call.1} parent=19 // pred_check_branch
          %189 = sbr.rel (%p187) target = $region28
        $region27: #{tpu_custom_call.1} parent=19 // pred_region
          %s190 = sand.u32 %s14, 1
          %s191 = scalar_lea.sflag [#allocation7], %s190
          %s192 = sand.u32 %s88, 1
          %s193 = smul.addr %s192, 256
          %s194 = scalar_lea.vmem [#allocation8], %s193
          %s195 = smul.u32 32, %s22
          %s197 = ssub.s32 4096, 4096
          %198 = vsyncadd %s191, %s197
          %s199 = smul.addr %s195, 2
          %s200 = smul.addr %s199, 64
          %s201 = scalar_lea.hbm %s2, %s200
          %s202 = sshll.u32 %s194, 4
          %s203 = int_to_ptr.vmem [resolvable:$true] %s202
          %208 = dma.hbm_to_vmem [thread:$0]  %s201, 4096, %s203, %s191, 128, 128, 8
        $region28: #{tpu_custom_call.1} parent=19 // pred_fallthru
          _
      $region20: #{tpu_custom_call.1} parent=5 // pred_fallthru
        _
      %p209 = scmp.le.s32.totalorder 1, %s14
      %p210 = scmp.lt.s32.totalorder %s14, 3
      %p211 = pnand %p209, %p210
      %p212 = pneg %p211
      // Predicated region
      $region29: #{tpu_custom_call.1} parent=5 // pred_check
        _
      $region30: #{tpu_custom_call.1} parent=5 // pred_check_branch
        %214 = sbr.rel (%p211) target = $region32
      $region31: #{tpu_custom_call.1} parent=5 // pred_region
        %s215 = ssub.s32 %s14, 1
        // Predicated region
        $region33: #{tpu_custom_call.1} parent=31 // pred_check
          %p216 = pneg %p52
        $region34: #{tpu_custom_call.1} parent=31 // pred_check_branch
          %218 = sbr.rel (%p216) target = $region36
        $region35: #{tpu_custom_call.1} parent=31 // pred_region
          %219 = dma.done [#allocation4], 512
        $region36: #{tpu_custom_call.1} parent=31 // pred_fallthru
          _
        %s220 = sand.u32 %s19, 1
        %s221 = scalar_lea.sflag [#allocation7], %s220
        %s222 = sand.u32 %s65, 1
        %s223 = smul.addr %s222, 512
        %s224 = scalar_lea.vmem [#allocation6], %s223
        // Predicated region
        $region37: #{tpu_custom_call.1} parent=31 // pred_check
          %p225 = pneg %p78
        $region38: #{tpu_custom_call.1} parent=31 // pred_check_branch
          %227 = sbr.rel (%p225) target = $region40
        $region39: #{tpu_custom_call.1} parent=31 // pred_region
          %228 = dma.done %s221, 8192
        $region40: #{tpu_custom_call.1} parent=31 // pred_fallthru
          _
        %s229 = sand.u32 %s19, 1
        %s230 = scalar_lea.sflag [#allocation7], %s229
        %s231 = sand.u32 %s91, 1
        %s232 = smul.addr %s231, 256
        %s233 = scalar_lea.vmem [#allocation8], %s232
        // Predicated region
        $region41: #{tpu_custom_call.1} parent=31 // pred_check
          %p234 = pneg %p104
        $region42: #{tpu_custom_call.1} parent=31 // pred_check_branch
          %236 = sbr.rel (%p234) target = $region44
        $region43: #{tpu_custom_call.1} parent=31 // pred_region
          %237 = dma.done %s230, 4096
        $region44: #{tpu_custom_call.1} parent=31 // pred_fallthru
          _
        %p238 = pneg %p52
        %p239 = pneg %p49
        %s240 = sand.u32 %s19, 1
        %s241 = scalar_lea.sflag [#allocation7], %s240
        %s242 = sand.u32 %s65, 1
        %s243 = smul.addr %s242, 512
        %s244 = scalar_lea.vmem [#allocation6], %s243
        %p245 = pneg %p78
        %p246 = pneg %p75
        %s247 = sand.u32 %s19, 1
        %s248 = scalar_lea.sflag [#allocation7], %s247
        %s249 = sand.u32 %s91, 1
        %s250 = smul.addr %s249, 256
        %s251 = scalar_lea.vmem [#allocation8], %s250
        %p252 = pneg %p104
        %p253 = pneg %p101
        %p254 = pneg %p130
        %p255 = pneg %p127
        %s256 = smul.u32 2, %s23
        %s257 = smul.u32 4, %s24
        %s258 = smul.u32 32, %s24
        %s259 = smul.u32 2, %s23
        %v260 = vld [vmem:[#allocation3] sm:$0xff]
        %v261 = vld [vmem:[#allocation3 + $0x8] sm:$0xff]
        %v262 = vld [vmem:[#allocation3 + $0x10] sm:$0xff]
        %v263 = vld [vmem:[#allocation3 + $0x18] sm:$0xff]
        %v264 = vpack.c.bf16 %v262, %v260
        %v265 = vpack.c.bf16 %v263, %v261
        %v266 = vld [vmem:[%s224] sm:$0xff]
        %v267 = vld [vmem:[%s224 + $0x8] sm:$0xff]
        %v268 = vld [vmem:[%s224 + $0x10] sm:$0xff]
        %v269 = vld [vmem:[%s224 + $0x18] sm:$0xff]
        %v270 = vld [vmem:[%s224 + $0x20] sm:$0xff]
        %v271 = vld [vmem:[%s224 + $0x28] sm:$0xff]
        %v272 = vld [vmem:[%s224 + $0x30] sm:$0xff]
        %v273 = vld [vmem:[%s224 + $0x38] sm:$0xff]
        %v274 = vld [vmem:[%s224 + $0x40] sm:$0xff]
        %v275 = vld [vmem:[%s224 + $0x48] sm:$0xff]
        %v276 = vld [vmem:[%s224 + $0x50] sm:$0xff]
        %v277 = vld [vmem:[%s224 + $0x58] sm:$0xff]
        %v278 = vld [vmem:[%s224 + $0x60] sm:$0xff]
        %v279 = vld [vmem:[%s224 + $0x68] sm:$0xff]
        %v280 = vld [vmem:[%s224 + $0x70] sm:$0xff]
        %v281 = vld [vmem:[%s224 + $0x78] sm:$0xff]
        %v282 = vld [vmem:[%s224 + $0x80] sm:$0xff]
        %v283 = vld [vmem:[%s224 + $0x88] sm:$0xff]
        %v284 = vld [vmem:[%s224 + $0x90] sm:$0xff]
        %v285 = vld [vmem:[%s224 + $0x98] sm:$0xff]
        %v286 = vld [vmem:[%s224 + $0xa0] sm:$0xff]
        %v287 = vld [vmem:[%s224 + $0xa8] sm:$0xff]
        %v288 = vld [vmem:[%s224 + $0xb0] sm:$0xff]
        %v289 = vld [vmem:[%s224 + $0xb8] sm:$0xff]
        %v290 = vld [vmem:[%s224 + $0xc0] sm:$0xff]
        %v291 = vld [vmem:[%s224 + $0xc8] sm:$0xff]
        %v292 = vld [vmem:[%s224 + $0xd0] sm:$0xff]
        %v293 = vld [vmem:[%s224 + $0xd8] sm:$0xff]
        %v294 = vld [vmem:[%s224 + $0xe0] sm:$0xff]
        %v295 = vld [vmem:[%s224 + $0xe8] sm:$0xff]
        %v296 = vld [vmem:[%s224 + $0xf0] sm:$0xff]
        %v297 = vld [vmem:[%s224 + $0xf8] sm:$0xff]
        %v298 = vld [vmem:[%s224 + $0x100] sm:$0xff]
        %v299 = vld [vmem:[%s224 + $0x108] sm:$0xff]
        %v300 = vld [vmem:[%s224 + $0x110] sm:$0xff]
        %v301 = vld [vmem:[%s224 + $0x118] sm:$0xff]
        %v302 = vld [vmem:[%s224 + $0x120] sm:$0xff]
        %v303 = vld [vmem:[%s224 + $0x128] sm:$0xff]
        %v304 = vld [vmem:[%s224 + $0x130] sm:$0xff]
        %v305 = vld [vmem:[%s224 + $0x138] sm:$0xff]
        %v306 = vld [vmem:[%s224 + $0x140] sm:$0xff]
        %v307 = vld [vmem:[%s224 + $0x148] sm:$0xff]
        %v308 = vld [vmem:[%s224 + $0x150] sm:$0xff]
        %v309 = vld [vmem:[%s224 + $0x158] sm:$0xff]
        %v310 = vld [vmem:[%s224 + $0x160] sm:$0xff]
        %v311 = vld [vmem:[%s224 + $0x168] sm:$0xff]
        %v312 = vld [vmem:[%s224 + $0x170] sm:$0xff]
        %v313 = vld [vmem:[%s224 + $0x178] sm:$0xff]
        %v314 = vld [vmem:[%s224 + $0x180] sm:$0xff]
        %v315 = vld [vmem:[%s224 + $0x188] sm:$0xff]
        %v316 = vld [vmem:[%s224 + $0x190] sm:$0xff]
        %v317 = vld [vmem:[%s224 + $0x198] sm:$0xff]
        %v318 = vld [vmem:[%s224 + $0x1a0] sm:$0xff]
        %v319 = vld [vmem:[%s224 + $0x1a8] sm:$0xff]
        %v320 = vld [vmem:[%s224 + $0x1b0] sm:$0xff]
        %v321 = vld [vmem:[%s224 + $0x1b8] sm:$0xff]
        %v322 = vld [vmem:[%s224 + $0x1c0] sm:$0xff]
        %v323 = vld [vmem:[%s224 + $0x1c8] sm:$0xff]
        %v324 = vld [vmem:[%s224 + $0x1d0] sm:$0xff]
        %v325 = vld [vmem:[%s224 + $0x1d8] sm:$0xff]
        %v326 = vld [vmem:[%s224 + $0x1e0] sm:$0xff]
        %v327 = vld [vmem:[%s224 + $0x1e8] sm:$0xff]
        %v328 = vld [vmem:[%s224 + $0x1f0] sm:$0xff]
        %v329 = vld [vmem:[%s224 + $0x1f8] sm:$0xff]
        %v394 = vunpack.c.l.b16 %v266
        %v395 = vunpack.c.h.b16 %v266
        %v396 = vunpack.c.l.b16 %v267
        %v397 = vunpack.c.h.b16 %v267
        %v398 = vunpack.c.l.b16 %v268
        %v399 = vunpack.c.h.b16 %v268
        %v400 = vunpack.c.l.b16 %v269
        %v401 = vunpack.c.h.b16 %v269
        %v402 = vunpack.c.l.b16 %v270
        %v403 = vunpack.c.h.b16 %v270
        %v404 = vunpack.c.l.b16 %v271
        %v405 = vunpack.c.h.b16 %v271
        %v406 = vunpack.c.l.b16 %v272
        %v407 = vunpack.c.h.b16 %v272
        %v408 = vunpack.c.l.b16 %v273
        %v409 = vunpack.c.h.b16 %v273
        %v410 = vunpack.c.l.b16 %v274
        %v411 = vunpack.c.h.b16 %v274
        %v412 = vunpack.c.l.b16 %v275
        %v413 = vunpack.c.h.b16 %v275
        %v414 = vunpack.c.l.b16 %v276
        %v415 = vunpack.c.h.b16 %v276
        %v416 = vunpack.c.l.b16 %v277
        %v417 = vunpack.c.h.b16 %v277
        %v418 = vunpack.c.l.b16 %v278
        %v419 = vunpack.c.h.b16 %v278
        %v420 = vunpack.c.l.b16 %v279
        %v421 = vunpack.c.h.b16 %v279
        %v422 = vunpack.c.l.b16 %v280
        %v423 = vunpack.c.h.b16 %v280
        %v424 = vunpack.c.l.b16 %v281
        %v425 = vunpack.c.h.b16 %v281
        %v426 = vunpack.c.l.b16 %v282
        %v427 = vunpack.c.h.b16 %v282
        %v428 = vunpack.c.l.b16 %v283
        %v429 = vunpack.c.h.b16 %v283
        %v430 = vunpack.c.l.b16 %v284
        %v431 = vunpack.c.h.b16 %v284
        %v432 = vunpack.c.l.b16 %v285
        %v433 = vunpack.c.h.b16 %v285
        %v434 = vunpack.c.l.b16 %v286
        %v435 = vunpack.c.h.b16 %v286
        %v436 = vunpack.c.l.b16 %v287
        %v437 = vunpack.c.h.b16 %v287
        %v438 = vunpack.c.l.b16 %v288
        %v439 = vunpack.c.h.b16 %v288
        %v440 = vunpack.c.l.b16 %v289
        %v441 = vunpack.c.h.b16 %v289
        %v442 = vunpack.c.l.b16 %v290
        %v443 = vunpack.c.h.b16 %v290
        %v444 = vunpack.c.l.b16 %v291
        %v445 = vunpack.c.h.b16 %v291
        %v446 = vunpack.c.l.b16 %v292
        %v447 = vunpack.c.h.b16 %v292
        %v448 = vunpack.c.l.b16 %v293
        %v449 = vunpack.c.h.b16 %v293
        %v450 = vunpack.c.l.b16 %v294
        %v451 = vunpack.c.h.b16 %v294
        %v452 = vunpack.c.l.b16 %v295
        %v453 = vunpack.c.h.b16 %v295
        %v454 = vunpack.c.l.b16 %v296
        %v455 = vunpack.c.h.b16 %v296
        %v456 = vunpack.c.l.b16 %v297
        %v457 = vunpack.c.h.b16 %v297
        %v458 = vunpack.c.l.b16 %v298
        %v459 = vunpack.c.h.b16 %v298
        %v460 = vunpack.c.l.b16 %v299
        %v461 = vunpack.c.h.b16 %v299
        %v462 = vunpack.c.l.b16 %v300
        %v463 = vunpack.c.h.b16 %v300
        %v464 = vunpack.c.l.b16 %v301
        %v465 = vunpack.c.h.b16 %v301
        %v466 = vunpack.c.l.b16 %v302
        %v467 = vunpack.c.h.b16 %v302
        %v468 = vunpack.c.l.b16 %v303
        %v469 = vunpack.c.h.b16 %v303
        %v470 = vunpack.c.l.b16 %v304
        %v471 = vunpack.c.h.b16 %v304
        %v472 = vunpack.c.l.b16 %v305
        %v473 = vunpack.c.h.b16 %v305
        %v474 = vunpack.c.l.b16 %v306
        %v475 = vunpack.c.h.b16 %v306
        %v476 = vunpack.c.l.b16 %v307
        %v477 = vunpack.c.h.b16 %v307
        %v478 = vunpack.c.l.b16 %v308
        %v479 = vunpack.c.h.b16 %v308
        %v480 = vunpack.c.l.b16 %v309
        %v481 = vunpack.c.h.b16 %v309
        %v482 = vunpack.c.l.b16 %v310
        %v483 = vunpack.c.h.b16 %v310
        %v484 = vunpack.c.l.b16 %v311
        %v485 = vunpack.c.h.b16 %v311
        %v486 = vunpack.c.l.b16 %v312
        %v487 = vunpack.c.h.b16 %v312
        %v488 = vunpack.c.l.b16 %v313
        %v489 = vunpack.c.h.b16 %v313
        %v490 = vunpack.c.l.b16 %v314
        %v491 = vunpack.c.h.b16 %v314
        %v492 = vunpack.c.l.b16 %v315
        %v493 = vunpack.c.h.b16 %v315
        %v494 = vunpack.c.l.b16 %v316
        %v495 = vunpack.c.h.b16 %v316
        %v496 = vunpack.c.l.b16 %v317
        %v497 = vunpack.c.h.b16 %v317
        %v498 = vunpack.c.l.b16 %v318
        %v499 = vunpack.c.h.b16 %v318
        %v500 = vunpack.c.l.b16 %v319
        %v501 = vunpack.c.h.b16 %v319
        %v502 = vunpack.c.l.b16 %v320
        %v503 = vunpack.c.h.b16 %v320
        %v504 = vunpack.c.l.b16 %v321
        %v505 = vunpack.c.h.b16 %v321
        %v506 = vunpack.c.l.b16 %v322
        %v507 = vunpack.c.h.b16 %v322
        %v508 = vunpack.c.l.b16 %v323
        %v509 = vunpack.c.h.b16 %v323
        %v510 = vunpack.c.l.b16 %v324
        %v511 = vunpack.c.h.b16 %v324
        %v512 = vunpack.c.l.b16 %v325
        %v513 = vunpack.c.h.b16 %v325
        %v514 = vunpack.c.l.b16 %v326
        %v515 = vunpack.c.h.b16 %v326
        %v516 = vunpack.c.l.b16 %v327
        %v517 = vunpack.c.h.b16 %v327
        %v518 = vunpack.c.l.b16 %v328
        %v519 = vunpack.c.h.b16 %v328
        %v520 = vunpack.c.l.b16 %v329
        %v521 = vunpack.c.h.b16 %v329
        %v522 = vpack.c.b16 %v398, %v394
        %v523 = vpack.c.b16 %v399, %v395
        %v524 = vpack.c.b16 %v400, %v396
        %v525 = vpack.c.b16 %v401, %v397
        %v526 = vpack.c.b16 %v406, %v402
        %v527 = vpack.c.b16 %v407, %v403
        %v528 = vpack.c.b16 %v408, %v404
        %v529 = vpack.c.b16 %v409, %v405
        %v530 = vpack.c.b16 %v414, %v410
        %v531 = vpack.c.b16 %v415, %v411
        %v532 = vpack.c.b16 %v416, %v412
        %v533 = vpack.c.b16 %v417, %v413
        %v534 = vpack.c.b16 %v422, %v418
        %v535 = vpack.c.b16 %v423, %v419
        %v536 = vpack.c.b16 %v424, %v420
        %v537 = vpack.c.b16 %v425, %v421
        %v538 = vpack.c.b16 %v430, %v426
        %v539 = vpack.c.b16 %v431, %v427
        %v540 = vpack.c.b16 %v432, %v428
        %v541 = vpack.c.b16 %v433, %v429
        %v542 = vpack.c.b16 %v438, %v434
        %v543 = vpack.c.b16 %v439, %v435
        %v544 = vpack.c.b16 %v440, %v436
        %v545 = vpack.c.b16 %v441, %v437
        %v546 = vpack.c.b16 %v446, %v442
        %v547 = vpack.c.b16 %v447, %v443
        %v548 = vpack.c.b16 %v448, %v444
        %v549 = vpack.c.b16 %v449, %v445
        %v550 = vpack.c.b16 %v454, %v450
        %v551 = vpack.c.b16 %v455, %v451
        %v552 = vpack.c.b16 %v456, %v452
        %v553 = vpack.c.b16 %v457, %v453
        %v554 = vpack.c.b16 %v462, %v458
        %v555 = vpack.c.b16 %v463, %v459
        %v556 = vpack.c.b16 %v464, %v460
        %v557 = vpack.c.b16 %v465, %v461
        %v558 = vpack.c.b16 %v470, %v466
        %v559 = vpack.c.b16 %v471, %v467
        %v560 = vpack.c.b16 %v472, %v468
        %v561 = vpack.c.b16 %v473, %v469
        %v562 = vpack.c.b16 %v478, %v474
        %v563 = vpack.c.b16 %v479, %v475
        %v564 = vpack.c.b16 %v480, %v476
        %v565 = vpack.c.b16 %v481, %v477
        %v566 = vpack.c.b16 %v486, %v482
        %v567 = vpack.c.b16 %v487, %v483
        %v568 = vpack.c.b16 %v488, %v484
        %v569 = vpack.c.b16 %v489, %v485
        %v570 = vpack.c.b16 %v494, %v490
        %v571 = vpack.c.b16 %v495, %v491
        %v572 = vpack.c.b16 %v496, %v492
        %v573 = vpack.c.b16 %v497, %v493
        %v574 = vpack.c.b16 %v502, %v498
        %v575 = vpack.c.b16 %v503, %v499
        %v576 = vpack.c.b16 %v504, %v500
        %v577 = vpack.c.b16 %v505, %v501
        %v578 = vpack.c.b16 %v510, %v506
        %v579 = vpack.c.b16 %v511, %v507
        %v580 = vpack.c.b16 %v512, %v508
        %v581 = vpack.c.b16 %v513, %v509
        %v582 = vpack.c.b16 %v518, %v514
        %v583 = vpack.c.b16 %v519, %v515
        %v584 = vpack.c.b16 %v520, %v516
        %v585 = vpack.c.b16 %v521, %v517
        %650 = vmatprep.subr.bf16.mxu0 %v523
        %651 = vmatpush1.bf16.msra.mxu0 %v522
        %652 = vmatprep.subr.bf16.mxu0 %v527
        %653 = vmatpush1.bf16.msra.mxu0 %v526
        %654 = vmatprep.subr.bf16.mxu0 %v531
        %655 = vmatpush1.bf16.msra.mxu0 %v530
        %656 = vmatprep.subr.bf16.mxu0 %v535
        %657 = vmatpush1.bf16.msra.mxu0 %v534
        %658 = vmatprep.subr.bf16.mxu0 %v539
        %659 = vmatpush1.bf16.msra.mxu0 %v538
        %660 = vmatprep.subr.bf16.mxu0 %v543
        %661 = vmatpush1.bf16.msra.mxu0 %v542
        %662 = vmatprep.subr.bf16.mxu0 %v547
        %663 = vmatpush1.bf16.msra.mxu0 %v546
        %664 = vmatprep.subr.bf16.mxu0 %v551
        %665 = vmatpush1.bf16.msra.mxu0 %v550
        %666 = vmatprep.subr.bf16.mxu0 %v555
        %667 = vmatpush1.bf16.msra.mxu0 %v554
        %668 = vmatprep.subr.bf16.mxu0 %v559
        %669 = vmatpush1.bf16.msra.mxu0 %v558
        %670 = vmatprep.subr.bf16.mxu0 %v563
        %671 = vmatpush1.bf16.msra.mxu0 %v562
        %672 = vmatprep.subr.bf16.mxu0 %v567
        %673 = vmatpush1.bf16.msra.mxu0 %v566
        %674 = vmatprep.subr.bf16.mxu0 %v571
        %675 = vmatpush1.bf16.msra.mxu0 %v570
        %676 = vmatprep.subr.bf16.mxu0 %v575
        %677 = vmatpush1.bf16.msra.mxu0 %v574
        %678 = vmatprep.subr.bf16.mxu0 %v579
        %679 = vmatpush1.bf16.msra.mxu0 %v578
        %680 = vmatprep.subr.bf16.mxu0 %v583
        %681 = vmatpush1.bf16.msra.mxu0 %v582
        %682 = vmatprep.mubr.bf16.mxu0 %v265
        %683 = vmatmul.mubr.bf16.gmra.mrb[0].mxu0 %v264
        %v684 = vpop.f32.mrb[0].mxu0
        %v685 = vadd.f32 0.0, %v684
        %v686 = vpop.f32.mrb[0].mxu0
        %v687 = vadd.f32 0.0, %v686
        %v688 = vpop.f32.mrb[0].mxu0
        %v689 = vadd.f32 0.0, %v688
        %v690 = vpop.f32.mrb[0].mxu0
        %v691 = vadd.f32 0.0, %v690
        %692 = vdwg.mxu0
        %693 = vmatprep.subr.bf16.mxu0 %v525
        %694 = vmatpush1.bf16.msra.mxu0 %v524
        %695 = vmatprep.subr.bf16.mxu0 %v529
        %696 = vmatpush1.bf16.msra.mxu0 %v528
        %697 = vmatprep.subr.bf16.mxu0 %v533
        %698 = vmatpush1.bf16.msra.mxu0 %v532
        %699 = vmatprep.subr.bf16.mxu0 %v537
        %700 = vmatpush1.bf16.msra.mxu0 %v536
        %701 = vmatprep.subr.bf16.mxu0 %v541
        %702 = vmatpush1.bf16.msra.mxu0 %v540
        %703 = vmatprep.subr.bf16.mxu0 %v545
        %704 = vmatpush1.bf16.msra.mxu0 %v544
        %705 = vmatprep.subr.bf16.mxu0 %v549
        %706 = vmatpush1.bf16.msra.mxu0 %v548
        %707 = vmatprep.subr.bf16.mxu0 %v553
        %708 = vmatpush1.bf16.msra.mxu0 %v552
        %709 = vmatprep.subr.bf16.mxu0 %v557
        %710 = vmatpush1.bf16.msra.mxu0 %v556
        %711 = vmatprep.subr.bf16.mxu0 %v561
        %712 = vmatpush1.bf16.msra.mxu0 %v560
        %713 = vmatprep.subr.bf16.mxu0 %v565
        %714 = vmatpush1.bf16.msra.mxu0 %v564
        %715 = vmatprep.subr.bf16.mxu0 %v569
        %716 = vmatpush1.bf16.msra.mxu0 %v568
        %717 = vmatprep.subr.bf16.mxu0 %v573
        %718 = vmatpush1.bf16.msra.mxu0 %v572
        %719 = vmatprep.subr.bf16.mxu0 %v577
        %720 = vmatpush1.bf16.msra.mxu0 %v576
        %721 = vmatprep.subr.bf16.mxu0 %v581
        %722 = vmatpush1.bf16.msra.mxu0 %v580
        %723 = vmatprep.subr.bf16.mxu0 %v585
        %724 = vmatpush1.bf16.msra.mxu0 %v584
        %725 = vmatprep.mubr.bf16.mxu0 %v265
        %726 = vmatmul.mubr.bf16.gmra.mrb[0].mxu0 %v264
        %v727 = vpop.f32.mrb[0].mxu0
        %v728 = vadd.f32 0.0, %v727
        %v729 = vpop.f32.mrb[0].mxu0
        %v730 = vadd.f32 0.0, %v729
        %v731 = vpop.f32.mrb[0].mxu0
        %v732 = vadd.f32 0.0, %v731
        %v733 = vpop.f32.mrb[0].mxu0
        %v734 = vadd.f32 0.0, %v733
        %735 = vdwg.mxu0
        %v736 = vsub.f32 0.0, %v685
        %v737 = vsub.f32 0.0, %v687
        %v738 = vsub.f32 0.0, %v689
        %v739 = vsub.f32 0.0, %v691
        %v740 = vmul.f32 %v736, 1.442695
        %v741 = vpow.pop %v740
        %v742 = vmul.f32 %v737, 1.442695
        %v743 = vpow.pop %v742
        %v744 = vmul.f32 %v738, 1.442695
        %v745 = vpow.pop %v744
        %v746 = vmul.f32 %v739, 1.442695
        %v747 = vpow.pop %v746
        %v748 = vadd.f32 %v741, 1.0
        %v749 = vadd.f32 %v743, 1.0
        %v750 = vadd.f32 %v745, 1.0
        %v751 = vadd.f32 %v747, 1.0
        %v752 = vrcp.pop %v748
        %v753 = vrcp.pop %v749
        %v754 = vrcp.pop %v750
        %v755 = vrcp.pop %v751
        %v756 = vmul.f32 %v685, %v752
        %v757 = vmul.f32 %v687, %v753
        %v758 = vmul.f32 %v689, %v754
        %v759 = vmul.f32 %v691, %v755
        %v760 = vmul.f32 %v756, %v728
        %v761 = vmul.f32 %v757, %v730
        %v762 = vmul.f32 %v758, %v732
        %v763 = vmul.f32 %v759, %v734
        %v764 = vpack.c.bf16 %v762, %v760
        %v765 = vpack.c.bf16 %v763, %v761
        %v766 = vld [vmem:[%s233] sm:$0xff]
        %v767 = vld [vmem:[%s233 + $0x8] sm:$0xff]
        %v768 = vld [vmem:[%s233 + $0x10] sm:$0xff]
        %v769 = vld [vmem:[%s233 + $0x18] sm:$0xff]
        %v770 = vld [vmem:[%s233 + $0x20] sm:$0xff]
        %v771 = vld [vmem:[%s233 + $0x28] sm:$0xff]
        %v772 = vld [vmem:[%s233 + $0x30] sm:$0xff]
        %v773 = vld [vmem:[%s233 + $0x38] sm:$0xff]
        %v774 = vld [vmem:[%s233 + $0x40] sm:$0xff]
        %v775 = vld [vmem:[%s233 + $0x48] sm:$0xff]
        %v776 = vld [vmem:[%s233 + $0x50] sm:$0xff]
        %v777 = vld [vmem:[%s233 + $0x58] sm:$0xff]
        %v778 = vld [vmem:[%s233 + $0x60] sm:$0xff]
        %v779 = vld [vmem:[%s233 + $0x68] sm:$0xff]
        %v780 = vld [vmem:[%s233 + $0x70] sm:$0xff]
        %v781 = vld [vmem:[%s233 + $0x78] sm:$0xff]
        %v782 = vld [vmem:[%s233 + $0x80] sm:$0xff]
        %v783 = vld [vmem:[%s233 + $0x88] sm:$0xff]
        %v784 = vld [vmem:[%s233 + $0x90] sm:$0xff]
        %v785 = vld [vmem:[%s233 + $0x98] sm:$0xff]
        %v786 = vld [vmem:[%s233 + $0xa0] sm:$0xff]
        %v787 = vld [vmem:[%s233 + $0xa8] sm:$0xff]
        %v788 = vld [vmem:[%s233 + $0xb0] sm:$0xff]
        %v789 = vld [vmem:[%s233 + $0xb8] sm:$0xff]
        %v790 = vld [vmem:[%s233 + $0xc0] sm:$0xff]
        %v791 = vld [vmem:[%s233 + $0xc8] sm:$0xff]
        %v792 = vld [vmem:[%s233 + $0xd0] sm:$0xff]
        %v793 = vld [vmem:[%s233 + $0xd8] sm:$0xff]
        %v794 = vld [vmem:[%s233 + $0xe0] sm:$0xff]
        %v795 = vld [vmem:[%s233 + $0xe8] sm:$0xff]
        %v796 = vld [vmem:[%s233 + $0xf0] sm:$0xff]
        %v797 = vld [vmem:[%s233 + $0xf8] sm:$0xff]
        %v830 = vunpack.c.l.b16 %v766
        %v831 = vunpack.c.h.b16 %v766
        %v832 = vunpack.c.l.b16 %v767
        %v833 = vunpack.c.h.b16 %v767
        %v834 = vunpack.c.l.b16 %v768
        %v835 = vunpack.c.h.b16 %v768
        %v836 = vunpack.c.l.b16 %v769
        %v837 = vunpack.c.h.b16 %v769
        %v838 = vunpack.c.l.b16 %v770
        %v839 = vunpack.c.h.b16 %v770
        %v840 = vunpack.c.l.b16 %v771
        %v841 = vunpack.c.h.b16 %v771
        %v842 = vunpack.c.l.b16 %v772
        %v843 = vunpack.c.h.b16 %v772
        %v844 = vunpack.c.l.b16 %v773
        %v845 = vunpack.c.h.b16 %v773
        %v846 = vunpack.c.l.b16 %v774
        %v847 = vunpack.c.h.b16 %v774
        %v848 = vunpack.c.l.b16 %v775
        %v849 = vunpack.c.h.b16 %v775
        %v850 = vunpack.c.l.b16 %v776
        %v851 = vunpack.c.h.b16 %v776
        %v852 = vunpack.c.l.b16 %v777
        %v853 = vunpack.c.h.b16 %v777
        %v854 = vunpack.c.l.b16 %v778
        %v855 = vunpack.c.h.b16 %v778
        %v856 = vunpack.c.l.b16 %v779
        %v857 = vunpack.c.h.b16 %v779
        %v858 = vunpack.c.l.b16 %v780
        %v859 = vunpack.c.h.b16 %v780
        %v860 = vunpack.c.l.b16 %v781
        %v861 = vunpack.c.h.b16 %v781
        %v862 = vunpack.c.l.b16 %v782
        %v863 = vunpack.c.h.b16 %v782
        %v864 = vunpack.c.l.b16 %v783
        %v865 = vunpack.c.h.b16 %v783
        %v866 = vunpack.c.l.b16 %v784
        %v867 = vunpack.c.h.b16 %v784
        %v868 = vunpack.c.l.b16 %v785
        %v869 = vunpack.c.h.b16 %v785
        %v870 = vunpack.c.l.b16 %v786
        %v871 = vunpack.c.h.b16 %v786
        %v872 = vunpack.c.l.b16 %v787
        %v873 = vunpack.c.h.b16 %v787
        %v874 = vunpack.c.l.b16 %v788
        %v875 = vunpack.c.h.b16 %v788
        %v876 = vunpack.c.l.b16 %v789
        %v877 = vunpack.c.h.b16 %v789
        %v878 = vunpack.c.l.b16 %v790
        %v879 = vunpack.c.h.b16 %v790
        %v880 = vunpack.c.l.b16 %v791
        %v881 = vunpack.c.h.b16 %v791
        %v882 = vunpack.c.l.b16 %v792
        %v883 = vunpack.c.h.b16 %v792
        %v884 = vunpack.c.l.b16 %v793
        %v885 = vunpack.c.h.b16 %v793
        %v886 = vunpack.c.l.b16 %v794
        %v887 = vunpack.c.h.b16 %v794
        %v888 = vunpack.c.l.b16 %v795
        %v889 = vunpack.c.h.b16 %v795
        %v890 = vunpack.c.l.b16 %v796
        %v891 = vunpack.c.h.b16 %v796
        %v892 = vunpack.c.l.b16 %v797
        %v893 = vunpack.c.h.b16 %v797
        %v894 = vpack.c.b16 %v832, %v830
        %v895 = vpack.c.b16 %v833, %v831
        %v896 = vpack.c.b16 %v836, %v834
        %v897 = vpack.c.b16 %v837, %v835
        %v898 = vpack.c.b16 %v840, %v838
        %v899 = vpack.c.b16 %v841, %v839
        %v900 = vpack.c.b16 %v844, %v842
        %v901 = vpack.c.b16 %v845, %v843
        %v902 = vpack.c.b16 %v848, %v846
        %v903 = vpack.c.b16 %v849, %v847
        %v904 = vpack.c.b16 %v852, %v850
        %v905 = vpack.c.b16 %v853, %v851
        %v906 = vpack.c.b16 %v856, %v854
        %v907 = vpack.c.b16 %v857, %v855
        %v908 = vpack.c.b16 %v860, %v858
        %v909 = vpack.c.b16 %v861, %v859
        %v910 = vpack.c.b16 %v864, %v862
        %v911 = vpack.c.b16 %v865, %v863
        %v912 = vpack.c.b16 %v868, %v866
        %v913 = vpack.c.b16 %v869, %v867
        %v914 = vpack.c.b16 %v872, %v870
        %v915 = vpack.c.b16 %v873, %v871
        %v916 = vpack.c.b16 %v876, %v874
        %v917 = vpack.c.b16 %v877, %v875
        %v918 = vpack.c.b16 %v880, %v878
        %v919 = vpack.c.b16 %v881, %v879
        %v920 = vpack.c.b16 %v884, %v882
        %v921 = vpack.c.b16 %v885, %v883
        %v922 = vpack.c.b16 %v888, %v886
        %v923 = vpack.c.b16 %v889, %v887
        %v924 = vpack.c.b16 %v892, %v890
        %v925 = vpack.c.b16 %v893, %v891
        %958 = vmatprep.subr.bf16.mxu0 %v895
        %959 = vmatpush1.bf16.msra.mxu0 %v894
        %960 = vmatprep.subr.bf16.mxu0 %v897
        %961 = vmatpush1.bf16.msra.mxu0 %v896
        %962 = vmatprep.subr.bf16.mxu0 %v899
        %963 = vmatpush1.bf16.msra.mxu0 %v898
        %964 = vmatprep.subr.bf16.mxu0 %v901
        %965 = vmatpush1.bf16.msra.mxu0 %v900
        %966 = vmatprep.subr.bf16.mxu0 %v903
        %967 = vmatpush1.bf16.msra.mxu0 %v902
        %968 = vmatprep.subr.bf16.mxu0 %v905
        %969 = vmatpush1.bf16.msra.mxu0 %v904
        %970 = vmatprep.subr.bf16.mxu0 %v907
        %971 = vmatpush1.bf16.msra.mxu0 %v906
        %972 = vmatprep.subr.bf16.mxu0 %v909
        %973 = vmatpush1.bf16.msra.mxu0 %v908
        %974 = vmatprep.subr.bf16.mxu0 %v911
        %975 = vmatpush1.bf16.msra.mxu0 %v910
        %976 = vmatprep.subr.bf16.mxu0 %v913
        %977 = vmatpush1.bf16.msra.mxu0 %v912
        %978 = vmatprep.subr.bf16.mxu0 %v915
        %979 = vmatpush1.bf16.msra.mxu0 %v914
        %980 = vmatprep.subr.bf16.mxu0 %v917
        %981 = vmatpush1.bf16.msra.mxu0 %v916
        %982 = vmatprep.subr.bf16.mxu0 %v919
        %983 = vmatpush1.bf16.msra.mxu0 %v918
        %984 = vmatprep.subr.bf16.mxu0 %v921
        %985 = vmatpush1.bf16.msra.mxu0 %v920
        %986 = vmatprep.subr.bf16.mxu0 %v923
        %987 = vmatpush1.bf16.msra.mxu0 %v922
        %988 = vmatprep.subr.bf16.mxu0 %v925
        %989 = vmatpush1.bf16.msra.mxu0 %v924
        %990 = vmatprep.mubr.bf16.mxu0 %v765
        %991 = vmatmul.mubr.bf16.gmra.mrb[0].mxu0 %v764
        %v992 = vpop.f32.mrb[0].mxu0
        %v993 = vadd.f32 0.0, %v992
        %v994 = vpop.f32.mrb[0].mxu0
        %v995 = vadd.f32 0.0, %v994
        %v996 = vpop.f32.mrb[0].mxu0
        %v997 = vadd.f32 0.0, %v996
        %v998 = vpop.f32.mrb[0].mxu0
        %v999 = vadd.f32 0.0, %v998
        %1000 = vdwg.mxu0
        %p1001 = scmp.eq.s32.totalorder %s24, 0
        // Predicated region
        $region45: #{tpu_custom_call.1} parent=31 // pred_check
          %p1002 = pneg %p1001
        $region46: #{tpu_custom_call.1} parent=31 // pred_check_branch
          %1004 = sbr.rel (%p1002) target = $region48
        $region47: #{tpu_custom_call.1} parent=31 // pred_region
          %1005 = vst [vmem:[#allocation2] sm:$0xff] %v993
          %1006 = vst [vmem:[#allocation2 + $0x8] sm:$0xff] %v995
          %1007 = vst [vmem:[#allocation2 + $0x10] sm:$0xff] %v997
          %1008 = vst [vmem:[#allocation2 + $0x18] sm:$0xff] %v999
        $region48: #{tpu_custom_call.1} parent=31 // pred_fallthru
          _
        %p1009 = scmp.gt.s32.totalorder %s24, 0
        %p1010 = scmp.lt.s32.totalorder %s24, 1
        %p1011 = pnand %p1009, %p1010
        %p1012 = pneg %p1011
        // Predicated region
        $region49: #{tpu_custom_call.1} parent=31 // pred_check
          _
        $region50: #{tpu_custom_call.1} parent=31 // pred_check_branch
          %1014 = sbr.rel (%p1011) target = $region52
        $region51: #{tpu_custom_call.1} parent=31 // pred_region
          %v1015 = vld [vmem:[#allocation2] sm:$0xff]
          %v1016 = vld [vmem:[#allocation2 + $0x8] sm:$0xff]
          %v1017 = vld [vmem:[#allocation2 + $0x10] sm:$0xff]
          %v1018 = vld [vmem:[#allocation2 + $0x18] sm:$0xff]
          %v1019 = vadd.f32 %v1015, %v993
          %v1020 = vadd.f32 %v1016, %v995
          %v1021 = vadd.f32 %v1017, %v997
          %v1022 = vadd.f32 %v1018, %v999
          %1023 = vst [vmem:[#allocation2] sm:$0xff] %v1019
          %1024 = vst [vmem:[#allocation2 + $0x8] sm:$0xff] %v1020
          %1025 = vst [vmem:[#allocation2 + $0x10] sm:$0xff] %v1021
          %1026 = vst [vmem:[#allocation2 + $0x18] sm:$0xff] %v1022
        $region52: #{tpu_custom_call.1} parent=31 // pred_fallthru
          _
        %p1027 = scmp.eq.s32.totalorder %s24, 1
        // Predicated region
        $region53: #{tpu_custom_call.1} parent=31 // pred_check
          %p1028 = pneg %p1027
        $region54: #{tpu_custom_call.1} parent=31 // pred_check_branch
          %1030 = sbr.rel (%p1028) target = $region56
        $region55: #{tpu_custom_call.1} parent=31 // pred_region
          %v1031 = vld [vmem:[#allocation2] sm:$0xff]
          %v1032 = vld [vmem:[#allocation2 + $0x8] sm:$0xff]
          %v1033 = vld [vmem:[#allocation2 + $0x10] sm:$0xff]
          %v1034 = vld [vmem:[#allocation2 + $0x18] sm:$0xff]
          %v1035 = vadd.f32 %v1031, %v993
          %v1036 = vadd.f32 %v1032, %v995
          %v1037 = vadd.f32 %v1033, %v997
          %v1038 = vadd.f32 %v1034, %v999
          %1039 = vst [vmem:[#allocation9] sm:$0xff] %v1035
          %1040 = vst [vmem:[#allocation9 + $0x8] sm:$0xff] %v1036
          %1041 = vst [vmem:[#allocation9 + $0x10] sm:$0xff] %v1037
          %1042 = vst [vmem:[#allocation9 + $0x18] sm:$0xff] %v1038
        $region56: #{tpu_custom_call.1} parent=31 // pred_fallthru
          _
        // Predicated region
        $region57: #{tpu_custom_call.1} parent=31 // pred_check
          %p1043 = pneg %p127
        $region58: #{tpu_custom_call.1} parent=31 // pred_check_branch
          %1045 = sbr.rel (%p1043) target = $region60
        $region59: #{tpu_custom_call.1} parent=31 // pred_region
          %s1046 = smul.u32 2, %s23
          %s1048 = ssub.s32 512, 512
          %1049 = vsyncadd [#allocation5], %s1048
          %s1050 = smul.addr %s1046, 2
          %s1051 = smul.addr %s1050, 128
          %s1052 = scalar_lea.hbm %s3, %s1051
          %s1053 = sshll.u32 [#allocation9], 4
          %s1054 = int_to_ptr.vmem [resolvable:$true] %s1053
          %1059 = dma.vmem_to_hbm [thread:$0]  %s1054, 512, %s1052, [#allocation5], 256, 256, 16
        $region60: #{tpu_custom_call.1} parent=31 // pred_fallthru
          _
        // Predicated region
        $region61: #{tpu_custom_call.1} parent=31 // pred_check
          %p1060 = pneg %p127
        $region62: #{tpu_custom_call.1} parent=31 // pred_check_branch
          %1062 = sbr.rel (%p1060) target = $region64
        $region63: #{tpu_custom_call.1} parent=31 // pred_region
          %1063 = dma.done [#allocation5], 512
        $region64: #{tpu_custom_call.1} parent=31 // pred_fallthru
          _
      $region32: #{tpu_custom_call.1} parent=5 // pred_fallthru
        _
      %p1064 = scmp.le.s32.totalorder 2, %s14
      // Predicated region
      $region65: #{tpu_custom_call.1} parent=5 // pred_check
        %p1065 = pneg %p1064
      $region66: #{tpu_custom_call.1} parent=5 // pred_check_branch
        %1067 = sbr.rel (%p1065) target = $region68
      $region67: #{tpu_custom_call.1} parent=5 // pred_region
        %s1068 = ssub.s32 %s14, 2
      $region68: #{tpu_custom_call.1} parent=5 // pred_fallthru
        _
    $region6: #{tpu_custom_call.1} parent=1 // loop_footer
      %s18 = sadd.s32 1, %s14
    $region7: #{tpu_custom_call.1} parent=1 // loop_footer_branch
      %13 = sbr.rel target = $region3
    $region8: #{tpu_custom_call.1} parent=1 // loop_exit
      _
    %1069 = vsyncpa [#allocation4], 1
    %s1070 = scalar_lea.sflag [#allocation4], 1
    %1071 = vsyncpa %s1070, 1
    %1072 = vsyncpa [#allocation7], 1
    %s1073 = scalar_lea.sflag [#allocation7], 1
    %1074 = vsyncpa %s1073, 1
    %1075 = vsyncpa [#allocation5], 1
    %s1076 = scalar_lea.sflag [#allocation5], 1
    %1077 = vsyncpa %s1076, 1

</llo_original>
